<compile_context>
chip_gen: v6e
topology: v6e:2x2x1
jax: 0.10.0
libtpu: 0.0.40
codegen_flags: <defaults>
</compile_context>

<pallas_src>
import functools

import jax
import jax.numpy as jnp
from jax.experimental import pallas as pl
from jax.experimental.pallas import tpu as pltpu

GAMMA = 1.5
ALPHA = 0.25
LANES = 128
SUBLANE = 16          # row-tile multiple (legal for f32 and bf16 tiles)
MAX_ROW_TILE = 2048   # (2048,128) f32 = 1 MiB/block; 2 inputs x 2 bufs = 4 MiB
N_PAR = 2             # leading "parallel" grid axis (megacore on v7x)


def _round_up(x, m):
    return (x + m - 1) // m * m


def _qfocal_kernel(pred_ref, true_ref, out_ref, *, gamma, alpha,
                   row_tile, inner_blocks, valid_rows, needs_mask):
    # Elementwise hot path on a (row_tile, 128) tile.
    x = pred_ref[...].astype(jnp.float32)
    z = true_ref[...].astype(jnp.float32)

    # One exp, reused for both the BCE log-term and the sigmoid.
    e = jnp.exp(-jnp.abs(x))                                  # EUP: exp
    # Numerically-stable BCEWithLogits (== nn.BCEWithLogitsLoss, reduction='none'):
    #   max(x, 0) - x*z + log(1 + exp(-|x|))
    bce = jnp.maximum(x, 0.0) - x * z + jnp.log1p(e)          # EUP: log
    # sigmoid(x) from the same exp:  x>=0 -> 1/(1+e),  x<0 -> e/(1+e)
    inv1pe = pl.reciprocal(1.0 + e)                           # exact reciprocal (EUP)
    pred_prob = jnp.where(x >= 0.0, inv1pe, e * inv1pe)

    d = jnp.abs(z - pred_prob)
    if gamma == 1.5:
        modulating_factor = d * jnp.sqrt(d)                   # d**1.5, NaN-free at d==0
    else:
        modulating_factor = d ** gamma

    # alpha_factor = z*alpha + (1-z)*(1-alpha) == (1-alpha) + z*(2*alpha-1)
    alpha_factor = (1.0 - alpha) + z * (2.0 * alpha - 1.0)
    loss = bce * (alpha_factor * modulating_factor)

    if needs_mask:
        # Only the partial boundary block has rows past `valid_rows`; their
        # contents are unspecified, so zero them before accumulating.
        blk = pl.program_id(0) * inner_blocks + pl.program_id(1)
        row = jax.lax.broadcasted_iota(jnp.int32, loss.shape, 0)
        loss = jnp.where(row < valid_rows - blk * row_tile, loss, 0.0)

    # (row_tile,128) -> (8,128) partial sums: layout-preserving reshape + pure
    # VPU adds; accumulate into the resident output block across the inner
    # ("arbitrary") reduction axis.
    partial = jnp.sum(loss.reshape(row_tile // 8, 8, LANES), axis=0)

    @pl.when(pl.program_id(1) == 0)
    def _init():
        out_ref[...] = jnp.zeros_like(out_ref)

    out_ref[...] += partial


def qfocal_loss(pred, true, gamma=GAMMA, alpha=ALPHA, reduction="mean"):
    """QFocalLoss forward. pred/true: same shape (e.g. NCHW). Returns scalar f32."""
    assert pred.shape == true.shape
    total = pred.size
    rows = pl.cdiv(total, LANES)

    # Wrapper-side padding only when the flat size is not a multiple of 128
    # lanes (or the array is tiny).  Padded positions use pred=0, true=0.5
    # so |true - sigmoid(pred)| == 0 -> exactly zero loss contribution.
    if total % LANES != 0 or rows < SUBLANE:
        rows_arr = _round_up(max(rows, SUBLANE), SUBLANE)
        pad = rows_arr * LANES - total
    else:
        rows_arr = rows
        pad = 0

    pred_flat = pred.reshape(-1)
    true_flat = true.reshape(-1)
    if pad:
        pred_flat = jnp.pad(pred_flat, (0, pad))                        # pred pad = 0
        true_flat = jnp.pad(true_flat, (0, pad), constant_values=0.5)   # true pad = 0.5
    pred2d = pred_flat.reshape(rows_arr, LANES)
    true2d = true_flat.reshape(rows_arr, LANES)

    # Tile rows: big lane-dense tiles, never larger than the array itself.
    row_tile = min(MAX_ROW_TILE, (rows_arr // SUBLANE) * SUBLANE)
    blocks_total = pl.cdiv(rows_arr, row_tile)
    needs_mask = (rows_arr % row_tile) != 0
    n_par = N_PAR if (blocks_total >= N_PAR and blocks_total % N_PAR == 0) else 1
    inner_blocks = blocks_total // n_par

    kernel = functools.partial(
        _qfocal_kernel,
        gamma=gamma, alpha=alpha, row_tile=row_tile,
        inner_blocks=inner_blocks, valid_rows=rows_arr, needs_mask=needs_mask,
    )

    partial_sums = pl.pallas_call(
        kernel,
        out_shape=jax.ShapeDtypeStruct((n_par * 8, LANES), jnp.float32),
        grid_spec=pltpu.PrefetchScalarGridSpec(
            num_scalar_prefetch=0,
            grid=(n_par, inner_blocks),
            in_specs=[
                pl.BlockSpec((row_tile, LANES),
                             lambda p, i: (p * inner_blocks + i, 0)),
                pl.BlockSpec((row_tile, LANES),
                             lambda p, i: (p * inner_blocks + i, 0)),
            ],
            out_specs=pl.BlockSpec((8, LANES), lambda p, i: (p, 0)),
        ),
        compiler_params=pltpu.CompilerParams(
            dimension_semantics=("parallel", "arbitrary"),
        ),
    )(pred2d, true2d)

    total_sum = jnp.sum(partial_sums)   # tiny epilogue reduce in the wrapper
    if reduction == "mean":
        return total_sum / jnp.float32(total)
    if reduction == "sum":
        return total_sum
    # TODO(synk): reduction='none' (elementwise loss output) not fused in-kernel.
    raise NotImplementedError("only 'mean' and 'sum' reductions are implemented")


def _reference(pred, true, gamma=GAMMA, alpha=ALPHA):
    # Matches the PyTorch module math (BCEWithLogitsLoss + QFL modulation, mean).
    x = pred.astype(jnp.float32)
    z = true.astype(jnp.float32)
    bce = jnp.maximum(x, 0.0) - x * z + jnp.log1p(jnp.exp(-jnp.abs(x)))
    p = jax.nn.sigmoid(x)
    af = z * alpha + (1.0 - z) * (1.0 - alpha)
    mf = jnp.abs(z - p) ** gamma
    return jnp.mean(bce * af * mf)


if __name__ == "__main__":
    key = jax.random.PRNGKey(0)
    keys = jax.random.split(key, 10)

    cases = [
        ((2, 4, 16, 16), keys[0], keys[1]),    # small NCHW, divides evenly, 1 block
        ((2, 3, 15, 15), keys[2], keys[3]),    # ragged size -> zero-loss padding path
        ((4, 32, 40, 40), keys[4], keys[5]),   # medium, single large tile, no pad/mask
        ((6, 32, 41, 41), keys[6], keys[7]),   # lane-ragged, 2 blocks, parallel axis + mask
        ((8, 48, 41, 41), keys[8], keys[9]),   # 3 blocks -> accumulation across inner axis + mask
    ]
    for shape, ka, kb in cases:
        pred = jax.random.normal(ka, shape, dtype=jnp.float32)
        true = jax.random.uniform(kb, shape, dtype=jnp.float32)  # soft QFL targets in [0,1]
        out = jax.block_until_ready(qfocal_loss(pred, true))
        ref = _reference(pred, true)
        assert jnp.allclose(out, ref, rtol=1e-4, atol=1e-6), (shape, float(out), float(ref))

    print("KERNEL_OK")
</pallas_src>

<mosaic_0001>
module attributes {stable_mosaic.version = 11 : i64} {
  func.func @_qfocal_kernel(%arg0: i32, %arg1: i32, %arg2: memref<16x128xf32, #tpu.memory_space<vmem>>, %arg3: memref<16x128xf32, #tpu.memory_space<vmem>>, %arg4: memref<8x128xf32, #tpu.memory_space<vmem>>) attributes {dimension_semantics = [#tpu.dimension_semantics<parallel>, #tpu.dimension_semantics<arbitrary>], iteration_bounds = array<i64: 1, 1>, scalar_prefetch = 0 : i64, scratch_operands = 0 : i64, tpu.core_type = #tpu.core_type<tc>, window_params = [{transform_indices = @transform_0, window_bounds = array<i64: 16, 128>}, {transform_indices = @transform_1, window_bounds = array<i64: 16, 128>}, {transform_indices = @transform_2, window_bounds = array<i64: 8, 128>}]} {
    %c0 = arith.constant 0 : index
    %c0_0 = arith.constant 0 : index
    %0 = vector.load %arg2[%c0, %c0_0] : memref<16x128xf32, #tpu.memory_space<vmem>>, vector<16x128xf32>
    %c0_1 = arith.constant 0 : index
    %c0_2 = arith.constant 0 : index
    %1 = vector.load %arg3[%c0_1, %c0_2] : memref<16x128xf32, #tpu.memory_space<vmem>>, vector<16x128xf32>
    %2 = math.absf %0 : vector<16x128xf32>
    %cst = arith.constant 0.000000e+00 : f32
    %3 = vector.broadcast %cst : f32 to vector<16x128xf32>
    %4 = arith.subf %3, %2 : vector<16x128xf32>
    %5 = math.exp %4 : vector<16x128xf32>
    %cst_3 = arith.constant 0.000000e+00 : f32
    %6 = vector.broadcast %cst_3 : f32 to vector<16x128xf32>
    %7 = arith.maximumf %0, %6 : vector<16x128xf32>
    %8 = arith.mulf %0, %1 : vector<16x128xf32>
    %9 = arith.subf %7, %8 : vector<16x128xf32>
    %10 = math.log1p %5 : vector<16x128xf32>
    %11 = arith.addf %9, %10 : vector<16x128xf32>
    %cst_4 = arith.constant 1.000000e+00 : f32
    %12 = vector.broadcast %cst_4 : f32 to vector<16x128xf32>
    %13 = arith.addf %12, %5 : vector<16x128xf32>
    %14 = tpu.reciprocal %13 : vector<16x128xf32> -> vector<16x128xf32>
    %cst_5 = arith.constant 0.000000e+00 : f32
    %15 = vector.broadcast %cst_5 : f32 to vector<16x128xf32>
    %16 = arith.cmpf oge, %0, %15 : vector<16x128xf32>
    %17 = arith.mulf %5, %14 : vector<16x128xf32>
    %18 = arith.select %16, %14, %17 : vector<16x128xi1>, vector<16x128xf32>
    %19 = arith.subf %1, %18 : vector<16x128xf32>
    %20 = math.absf %19 : vector<16x128xf32>
    %21 = math.sqrt %20 : vector<16x128xf32>
    %22 = arith.mulf %20, %21 : vector<16x128xf32>
    %cst_6 = arith.constant -5.000000e-01 : f32
    %23 = vector.broadcast %cst_6 : f32 to vector<16x128xf32>
    %24 = arith.mulf %1, %23 : vector<16x128xf32>
    %cst_7 = arith.constant 7.500000e-01 : f32
    %25 = vector.broadcast %cst_7 : f32 to vector<16x128xf32>
    %26 = arith.addf %25, %24 : vector<16x128xf32>
    %27 = arith.mulf %26, %22 : vector<16x128xf32>
    %28 = arith.mulf %11, %27 : vector<16x128xf32>
    %29 = vector.shape_cast %28 : vector<16x128xf32> to vector<2x8x128xf32>
    %cst_8 = arith.constant dense<0.000000e+00> : vector<8x128xf32>
    %30 = vector.multi_reduction <add>, %29, %cst_8 [0] : vector<2x8x128xf32> to vector<8x128xf32>
    %c0_i32 = arith.constant 0 : i32
    %31 = arith.cmpi eq, %arg1, %c0_i32 : i32
    %32 = arith.extui %31 : i1 to i32
    %c0_i32_9 = arith.constant 0 : i32
    %33 = arith.cmpi ne, %32, %c0_i32_9 : i32
    scf.if %33 {
      %cst_14 = arith.constant 0.000000e+00 : f32
      %37 = vector.broadcast %cst_14 : f32 to vector<8x128xf32>
      %c0_15 = arith.constant 0 : index
      %c0_16 = arith.constant 0 : index
      %38 = vector.load %arg4[%c0_15, %c0_16] : memref<8x128xf32, #tpu.memory_space<vmem>>, vector<8x128xf32>
      tpu.vector_store %arg4[%c0_15, %c0_16], %37 {strides = array<i32>} : memref<8x128xf32, #tpu.memory_space<vmem>>, vector<8x128xf32>,
    } else {
    }
    %c0_10 = arith.constant 0 : index
    %c0_11 = arith.constant 0 : index
    %34 = vector.load %arg4[%c0_10, %c0_11] : memref<8x128xf32, #tpu.memory_space<vmem>>, vector<8x128xf32>
    %35 = arith.addf %34, %30 : vector<8x128xf32>
    %c0_12 = arith.constant 0 : index
    %c0_13 = arith.constant 0 : index
    %36 = vector.load %arg4[%c0_12, %c0_13] : memref<8x128xf32, #tpu.memory_space<vmem>>, vector<8x128xf32>
    tpu.vector_store %arg4[%c0_12, %c0_13], %35 {strides = array<i32>} : memref<8x128xf32, #tpu.memory_space<vmem>>, vector<8x128xf32>,
    return
  }
  func.func @transform_0(%arg0: i32, %arg1: i32) -> (i32, i32) {
    %c1_i32 = arith.constant 1 : i32
    %0 = arith.muli %arg0, %c1_i32 : i32
    %1 = arith.addi %0, %arg1 : i32
    %c0_i32 = arith.constant 0 : i32
    %c0_i32_0 = arith.constant 0 : i32
    return %1, %c0_i32 : i32, i32
  }
  func.func @transform_1(%arg0: i32, %arg1: i32) -> (i32, i32) {
    %c1_i32 = arith.constant 1 : i32
    %0 = arith.muli %arg0, %c1_i32 : i32
    %1 = arith.addi %0, %arg1 : i32
    %c0_i32 = arith.constant 0 : i32
    %c0_i32_0 = arith.constant 0 : i32
    return %1, %c0_i32 : i32, i32
  }
  func.func @transform_2(%arg0: i32, %arg1: i32) -> (i32, i32) {
    %c0_i32 = arith.constant 0 : i32
    %c0_i32_0 = arith.constant 0 : i32
    return %arg0, %c0_i32 : i32, i32
  }
}

</mosaic_0001>

<llo_original>
// kernel: tpu_custom_call.1
$region0: #{tpu_custom_call.1}
  #allocation0 [shape = 'u32[]', space=smem, size = 0x4, offset = 0x4, fixed_abs, tag = 'smem constant byte address 0x4 - core index']
  #allocation1 [shape = 'u32[144,128]{1,0:T(1,128)}', space=vmem, size = 0x12000, scoped, tag = 'internal scratch']
  %s0 = inlined_call_operand.hbm [shape: f32[16,128], index: 0, kind: input, shape index: {}]
  %s1 = inlined_call_operand.hbm [shape: f32[16,128], index: 1, kind: input, shape index: {}]
  %s2 = inlined_call_operand.hbm [shape: f32[8,128], index: 2, kind: output, shape index: {}]
  %s3 = sld [smem:[#allocation0]]
  $region30: #{tpu_custom_call.1} parent=0
    _
  %s5 = ssub.s32 1, %s3
  %s6 = scalar_select 0, %s5, %s3
  $region1: #{tpu_custom_call.1} parent=0
    #allocation2 [shape = 'u8[8192]{0}', space=vmem, size = 0x2000, scoped, tag = 'input window, operand 0, single buffered']
    #allocation3 [shape = 's32[1]{0}', space=sflag, size = 0x4, scoped, tag = 'scoped memory for tpu_custom_call.1']
    #allocation4 [shape = 's32[1]{0}', space=sflag, size = 0x4, scoped, tag = 'scoped memory for tpu_custom_call.1']
    #allocation5 [shape = 'u8[8192]{0}', space=vmem, size = 0x2000, scoped, tag = 'input window, operand 1, single buffered']
    #allocation6 [shape = 's32[1]{0}', space=sflag, size = 0x4, scoped, tag = 'scoped memory for tpu_custom_call.1']
    #allocation7 [shape = 'u8[4096]{0}', space=vmem, size = 0x1000, scoped, tag = 'output window, operand 0, single buffered']
    %7 = vsyncpa [#allocation3], 0
    %8 = vsyncpa [#allocation6], 0
    %9 = vsyncpa [#allocation4], 0
    // Predicated region
    $region2: #{tpu_custom_call.1} parent=1 // pred_check
      _
    $region3: #{tpu_custom_call.1} parent=1 // pred_check_branch
      %11 = sbr.rel (0) target = $region5
    $region4: #{tpu_custom_call.1} parent=1 // pred_region
      %s12 = sadd.s32 0, 0
      %s13 = smul.u32 2, %s12
      %s15 = ssub.s32 256, 256
      %16 = vsyncadd [#allocation3], %s15
      %s17 = smul.addr %s13, 128
      %s18 = scalar_lea.hbm %s0, %s17
      %s19 = sshll.u32 [#allocation2], 4
      %s20 = int_to_ptr.vmem [resolvable:$true] %s19
      %25 = dma.hbm_to_vmem [thread:$0]  %s18, 256, %s20, [#allocation3], 128, 128, 8
    $region5: #{tpu_custom_call.1} parent=1 // pred_fallthru
      _
    // Predicated region
    $region6: #{tpu_custom_call.1} parent=1 // pred_check
      _
    $region7: #{tpu_custom_call.1} parent=1 // pred_check_branch
      %27 = sbr.rel (0) target = $region9
    $region8: #{tpu_custom_call.1} parent=1 // pred_region
      %s28 = sadd.s32 0, 0
      %s29 = smul.u32 2, %s28
      %s31 = ssub.s32 256, 256
      %32 = vsyncadd [#allocation6], %s31
      %s33 = smul.addr %s29, 128
      %s34 = scalar_lea.hbm %s1, %s33
      %s35 = sshll.u32 [#allocation5], 4
      %s36 = int_to_ptr.vmem [resolvable:$true] %s35
      %41 = dma.hbm_to_vmem [thread:$0]  %s34, 256, %s36, [#allocation6], 128, 128, 8
    $region9: #{tpu_custom_call.1} parent=1 // pred_fallthru
      _
    // Predicated region
    $region10: #{tpu_custom_call.1} parent=1 // pred_check
      _
    $region11: #{tpu_custom_call.1} parent=1 // pred_check_branch
      %43 = sbr.rel (0) target = $region13
    $region12: #{tpu_custom_call.1} parent=1 // pred_region
      %44 = dma.done [#allocation3], 256
    $region13: #{tpu_custom_call.1} parent=1 // pred_fallthru
      _
    // Predicated region
    $region14: #{tpu_custom_call.1} parent=1 // pred_check
      _
    $region15: #{tpu_custom_call.1} parent=1 // pred_check_branch
      %46 = sbr.rel (0) target = $region17
    $region16: #{tpu_custom_call.1} parent=1 // pred_region
      %47 = dma.done [#allocation6], 256
    $region17: #{tpu_custom_call.1} parent=1 // pred_fallthru
      _
    %s48 = sadd.s32 0, 0
    %s49 = smul.u32 2, %s48
    %s50 = sadd.s32 0, 0
    %s51 = smul.u32 2, %s50
    %v52 = vld [vmem:[#allocation2] sm:$0xff]
    %v53 = vld [vmem:[#allocation2 + $0x8] sm:$0xff]
    %v54 = vld [vmem:[#allocation5] sm:$0xff]
    %v55 = vld [vmem:[#allocation5 + $0x8] sm:$0xff]
    %v56 = vand.u32 2147483647, %v52
    %v57 = vand.u32 2147483647, %v53
    %v58 = vsub.f32 0.0, %v56
    %v59 = vsub.f32 0.0, %v57
    %v60 = vmul.f32 %v58, 1.442695
    %v61 = vpow.pop %v60
    %v62 = vmul.f32 %v59, 1.442695
    %v63 = vpow.pop %v62
    %v64 = vmax.f32 %v52, 0.0
    %v65 = vmax.f32 %v53, 0.0
    %v66 = vmul.f32 %v52, %v54
    %v67 = vmul.f32 %v53, %v55
    %v68 = vsub.f32 %v64, %v66
    %v69 = vsub.f32 %v65, %v67
    %v70 = vadd.f32 %v61, 1.0
    %v71 = vlog2.pop %v70
    %v72 = vmul.f32 %v71, 0.6931472
    %v73 = vmul.f32 -0.5, %v61
    %v74 = vadd.f32 %v73, 1.0
    %v75 = vmul.f32 %v74, %v61
    %v76 = vand.u32 2147483647, %v61
    %vm77 = vcmp.lt.f32.partialorder %v76, 0.0004427343
    %v78 = vsel %vm77, %v75, %v72
    %v79 = vadd.f32 %v63, 1.0
    %v80 = vlog2.pop %v79
    %v81 = vmul.f32 %v80, 0.6931472
    %v82 = vmul.f32 -0.5, %v63
    %v83 = vadd.f32 %v82, 1.0
    %v84 = vmul.f32 %v83, %v63
    %v85 = vand.u32 2147483647, %v63
    %vm86 = vcmp.lt.f32.partialorder %v85, 0.0004427343
    %v87 = vsel %vm86, %v84, %v81
    %v88 = vadd.f32 %v68, %v78
    %v89 = vadd.f32 %v69, %v87
    %v90 = vadd.f32 %v61, 1.0
    %v91 = vadd.f32 %v63, 1.0
    %v92 = vrcp.pop %v90
    %v93 = vrcp.pop %v91
    %vm94 = vcmp.ge.f32.partialorder %v52, 0.0
    %vm95 = vcmp.ge.f32.partialorder %v53, 0.0
    %v96 = vmul.f32 %v61, %v92
    %v97 = vmul.f32 %v63, %v93
    %v98 = vsel %vm94, %v92, %v96
    %v99 = vsel %vm95, %v93, %v97
    %v100 = vsub.f32 %v54, %v98
    %v101 = vsub.f32 %v55, %v99
    %v102 = vand.u32 2147483647, %v100
    %v103 = vand.u32 2147483647, %v101
    %v104 = vrsqrt.pop %v102
    %v105 = vmul.f32 %v102, %v104
    %vm106 = vcmp.eq.f32.partialorder %v102, inf
    %v107 = vsel %vm106, %v102, %v105
    %vm108 = vcmp.eq.f32.partialorder %v102, 0.0
    %v109 = vand.u32 %v102, 2147483648
    %v110 = vsel %vm108, %v109, %v107
    %v111 = vrsqrt.pop %v103
    %v112 = vmul.f32 %v103, %v111
    %vm113 = vcmp.eq.f32.partialorder %v103, inf
    %v114 = vsel %vm113, %v103, %v112
    %vm115 = vcmp.eq.f32.partialorder %v103, 0.0
    %v116 = vand.u32 %v103, 2147483648
    %v117 = vsel %vm115, %v116, %v114
    %v118 = vmul.f32 %v102, %v110
    %v119 = vmul.f32 %v103, %v117
    %v120 = vmul.f32 %v54, -0.5
    %v121 = vmul.f32 %v55, -0.5
    %v122 = vadd.f32 %v120, 0.75
    %v123 = vadd.f32 %v121, 0.75
    %v124 = vmul.f32 %v122, %v118
    %v125 = vmul.f32 %v123, %v119
    %v126 = vmul.f32 %v88, %v124
    %v127 = vmul.f32 %v89, %v125
    %v128 = vadd.f32 %v126, %v127
    %p129 = scmp.eq.s32.totalorder 0, 0
    // Predicated region
    $region18: #{tpu_custom_call.1} parent=1 // pred_check
      %p130 = pneg %p129
    $region19: #{tpu_custom_call.1} parent=1 // pred_check_branch
      %132 = sbr.rel (%p130) target = $region21
    $region20: #{tpu_custom_call.1} parent=1 // pred_region
      %133 = vst [vmem:[#allocation7] sm:$0xff] 0.0
    $region21: #{tpu_custom_call.1} parent=1 // pred_fallthru
      _
    %v134 = vld [vmem:[#allocation7] sm:$0xff]
    %v135 = vadd.f32 %v134, %v128
    %136 = vst [vmem:[#allocation7] sm:$0xff] %v135
    // Predicated region
    $region22: #{tpu_custom_call.1} parent=1 // pred_check
      _
    $region23: #{tpu_custom_call.1} parent=1 // pred_check_branch
      %138 = sbr.rel (0) target = $region25
    $region24: #{tpu_custom_call.1} parent=1 // pred_region
      %s140 = ssub.s32 128, 128
      %141 = vsyncadd [#allocation4], %s140
      %s143 = sshll.u32 [#allocation7], 4
      %s144 = int_to_ptr.vmem [resolvable:$true] %s143
      %146 = dma.vmem_to_hbm [thread:$0]  %s144, 128, %s2, [#allocation4]
    $region25: #{tpu_custom_call.1} parent=1 // pred_fallthru
      _
    // Predicated region
    $region26: #{tpu_custom_call.1} parent=1 // pred_check
      _
    $region27: #{tpu_custom_call.1} parent=1 // pred_check_branch
      %148 = sbr.rel (0) target = $region29
    $region28: #{tpu_custom_call.1} parent=1 // pred_region
      %149 = dma.done [#allocation4], 128
    $region29: #{tpu_custom_call.1} parent=1 // pred_fallthru
      _
    %150 = vsyncpa [#allocation3], 1
    %151 = vsyncpa [#allocation6], 1
    %152 = vsyncpa [#allocation4], 1

</llo_original>
